<compile_context>
chip_gen: v6e
topology: v6e:2x2x1
jax: 0.10.0
libtpu: 0.0.40
codegen_flags: <defaults>
</compile_context>

<pallas_src>
import jax
import jax.numpy as jnp
from jax.experimental import pallas as pl
from jax.experimental.pallas import tpu as pltpu


# ----------------------------- kernels --------------------------------------


def gcn_layer1_kernel(adj_ref, m1_ref, dinv_ref, m2_ref):
    """m2_tile = dinv_rows^2 * relu((A+I)_tile @ M1)          -> bf16 [tm, H].

    M1 = Dinv @ (X @ W1) is precomputed in the wrapper, so
      h1 = relu(A_hat X W1) = dinv * relu((A+I) @ M1)         (dinv > 0 commutes with relu)
    and m2 = Dinv @ h1 is the column-pre-scaled operand phase 2 needs.
    """
    # int8 {0,1} -> f32 -> bf16 (exact; VPU cast fully hidden behind the adjacency DMA)
    a = adj_ref[...].astype(jnp.float32).astype(jnp.bfloat16)          # [tm, N]
    s = jnp.dot(a, m1_ref[...], preferred_element_type=jnp.float32)    # [tm, H] f32
    d = dinv_ref[...]                                                  # [tm, 1] f32
    m2_ref[...] = (d * d * jnp.maximum(s, 0.0)).astype(m2_ref.dtype)


def logits_onehot_kernel(adj_ref, m2_ref, dinv_ref, w2fc_ref, gb_ref, z_ref):
    """z_tile = one-hot(argmax(dinv_rows * ((A+I)_tile @ M2) @ (W2 Wfc) + bias + gumbel)).

    Softmax omitted: argmax(softmax(y)) == argmax(y), so the hard forward value is
    identical and we skip exp / lane-sum / reciprocal. Padded class lanes carry a
    -1e30 bias (inside gb) so they can never win the argmax.
    """
    a = adj_ref[...].astype(jnp.float32).astype(jnp.bfloat16)          # [tm, N]
    t = jnp.dot(a, m2_ref[...], preferred_element_type=jnp.float32)    # [tm, H]  f32
    t = (dinv_ref[...] * t).astype(jnp.bfloat16)                       # row scaling (H-wide)
    logits = jnp.dot(t, w2fc_ref[...],
                     preferred_element_type=jnp.float32)               # [tm, CP] f32
    y = logits + gb_ref[...]                                           # + bias + gumbel
    tm, cp = y.shape
    col = jax.lax.broadcasted_iota(jnp.int32, (tm, cp), 1)
    m = jnp.max(y, axis=-1, keepdims=True)
    # index of FIRST maximum (matches torch argmax/scatter semantics)
    first_idx = jnp.min(jnp.where(y == m, col, cp), axis=-1, keepdims=True)
    z_ref[...] = jnp.where(col == first_idx, 1.0, 0.0).astype(z_ref.dtype)


# ----------------------------- tiling helpers --------------------------------


def _vmem_budget_bytes():
    """Per-TensorCore scoped-VMEM budget used for tile sizing.

    Generation-aware but conservative: v7x has only 64 MiB physical VMEM per TC and
    the 'parallel' (megacore) axis duplicates resident operands in both cores, so we
    cap at cap/4 (<= 48 MiB). v5e/v6e (128 MiB) simply land on the 48 MiB cap.
    """
    try:
        cap = int(pltpu.get_tpu_info().vmem_capacity_bytes)
    except Exception:
        cap = 64 * 1024 * 1024
    return min(max(cap // 4, 16 * 1024 * 1024), 48 * 1024 * 1024)


def _pick_row_tile(n, per_row_stream_bytes, resident_bytes, vmem_budget):
    """Largest row tile tm dividing N such that double-buffered streamed blocks plus
    (conservatively double-buffered) resident operands fit the VMEM budget.
    Multiples of 16 preferred (bf16 native sublane tile); whole-array block for
    small N (avoids pure per-step grid overhead)."""
    if n <= 256:
        return n
    budget = max(vmem_budget - 2 * resident_bytes, 1 << 20)
    cap = max(16, min(budget // (2 * per_row_stream_bytes), 1024, n))
    for tm in range((cap // 16) * 16, 0, -16):        # multiples of 16 first
        if n % tm == 0:
            return tm
    for tm in range((cap // 8) * 8, 0, -8):           # 8-granular fallback
        if n % tm == 0:
            return tm
    # TODO(synk): non-divisible N would need masked partial blocks; fall back to one block.
    return n


# ----------------------------- wrapper ---------------------------------------


def advers_mask_forward(adj_i8, dinv, x, w1, w2, wfc, bfc, gumbel):
    """adj_i8: binary (A+I) as int8 [N,N]; dinv: D^{-1/2} diagonal [N]."""
    N, FIN = x.shape
    H = w1.shape[1]
    C = wfc.shape[1]
    CP = max(128, ((C + 127) // 128) * 128)          # lane-dense class width

    # ---- parameter preprocessing (glue, runs once per call) -----------------
    dinv_col = dinv.astype(jnp.float32).reshape(N, 1)
    # M1 = Dinv @ (X @ W1): column degree-scaling folded into the dense operand.
    m1 = (dinv_col * jnp.dot(x.astype(jnp.float32), w1.astype(jnp.float32))
          ).astype(jnp.bfloat16)                                           # [N, H]
    # Fold fc into layer 2:  W2fc = W2 @ Wfc  (exact -- no nonlinearity in between;
    # assumes the generator's 2nd GCN layer has no bias / no activation).
    w2fc = jnp.dot(w2.astype(jnp.float32), wfc.astype(jnp.float32))        # [H, C]
    w2fc = jnp.pad(w2fc, ((0, 0), (0, CP - C))).astype(jnp.bfloat16)       # [H, CP]
    # Fold fc bias into the gumbel noise; padded classes get -1e30 (never argmax'd).
    gb = gumbel.astype(jnp.float32) + bfc.astype(jnp.float32)[None, :]
    gb = jnp.pad(gb, ((0, 0), (0, CP - C)), constant_values=-1e30)         # [N, CP]

    # ---- tile sizing (VMEM-aware; adjacency bytes dominate the stream) ------
    per_row_stream = N * 1 + CP * 4 + CP * 2 + H * 2 + 4   # adj(int8)+gb+z+m2+dinv per row
    resident = N * H * 2 + H * CP * 2                      # m1/m2 + W2fc residents
    vmem_budget = _vmem_budget_bytes()
    tm = _pick_row_tile(N, per_row_stream, resident, vmem_budget)
    grid = (N // tm,)

    # Residents could be single-buffered (pipeline_mode=pl.Buffered(1)) to halve their
    # footprint; instead we conservatively budget 2x above and keep default buffering.
    compiler_params = pltpu.CompilerParams(
        dimension_semantics=("parallel",),
        vmem_limit_bytes=int(2 * vmem_budget),
    )

    # ---- phase 1: M2 = Dinv @ relu(A_hat X W1)   (row-tiled over nodes) -----
    ce1 = pl.CostEstimate(
        flops=2 * N * N * H,
        transcendentals=0,
        bytes_accessed=N * N * 1 + N * H * 2 + N * 4 + N * H * 2,
    )
    m2 = pl.pallas_call(
        gcn_layer1_kernel,
        out_shape=jax.ShapeDtypeStruct((N, H), jnp.bfloat16),
        grid=grid,
        in_specs=[
            pl.BlockSpec((tm, N), lambda i: (i, 0)),      # (A+I) row tile (int8, streamed)
            pl.BlockSpec((N, H), lambda i: (0, 0)),       # M1        (resident)
            pl.BlockSpec((tm, 1), lambda i: (i, 0)),      # dinv rows (streamed, tiny)
        ],
        out_specs=pl.BlockSpec((tm, H), lambda i: (i, 0)),
        compiler_params=compiler_params,
        cost_estimate=ce1,
    )(adj_i8, m1, dinv_col)

    # ---- phase 2: z = onehot(argmax(dinv*((A+I)@M2)@W2fc + bias + gumbel)) --
    ce2 = pl.CostEstimate(
        flops=2 * N * N * H + 2 * N * H * CP,
        transcendentals=0,
        bytes_accessed=N * N * 1 + N * H * 2 + N * 4 + H * CP * 2
        + N * CP * 4 + N * CP * 2,
    )
    z_pad = pl.pallas_call(
        logits_onehot_kernel,
        out_shape=jax.ShapeDtypeStruct((N, CP), jnp.bfloat16),
        grid=grid,
        in_specs=[
            pl.BlockSpec((tm, N), lambda i: (i, 0)),      # (A+I) row tile (int8, streamed)
            pl.BlockSpec((N, H), lambda i: (0, 0)),       # M2        (resident)
            pl.BlockSpec((tm, 1), lambda i: (i, 0)),      # dinv rows (streamed, tiny)
            pl.BlockSpec((H, CP), lambda i: (0, 0)),      # W2 @ Wfc  (resident)
            pl.BlockSpec((tm, CP), lambda i: (i, 0)),     # gumbel + bias row tile
        ],
        out_specs=pl.BlockSpec((tm, CP), lambda i: (i, 0)),
        compiler_params=compiler_params,
        cost_estimate=ce2,
    )(adj_i8, m2, dinv_col, w2fc, gb)

    # bf16 0/1 one-hot; slice off the padded classes (consumer may cast to f32 if needed).
    return z_pad[:, :C]


# ----------------------------- glue ------------------------------------------


def build_binary_adjacency(edge_index, num_nodes):
    """Binary (A + I) as int8 plus D^{-1/2} diagonal (glue, plain JAX).

    A_hat = D^{-1/2}(A+I)D^{-1/2} is reconstructed inside the kernels from these two,
    so the big N^2 stream is 1-byte exact 0/1 values instead of bf16-rounded floats.
    NOTE: assumes edge_index contains no self-loops (the demo graph doesn't);
    otherwise the diagonal would become 2, diverging from PyG's gcn_norm.
    """
    src, dst = edge_index[0], edge_index[1]
    a = jnp.zeros((num_nodes, num_nodes), jnp.float32)
    a = a.at[src, dst].set(1.0)
    a = a + jnp.eye(num_nodes, dtype=jnp.float32)
    deg = jnp.sum(a, axis=1)
    dinv = 1.0 / jnp.sqrt(jnp.maximum(deg, 1.0))
    return a.astype(jnp.int8), dinv.astype(jnp.float32)


if __name__ == "__main__":
    # Small deterministic setup consistent with the module:
    #   num_nodes N=16, node features Fin=8, generator hidden H=32 (= fc_in_channels),
    #   fc_out_channels C=4.
    N, FIN, H, C = 16, 8, 32, 4

    key = jax.random.PRNGKey(0)
    kx, kw1, kw2, kwfc, kb, kg = jax.random.split(key, 6)

    x = jax.random.normal(kx, (N, FIN), dtype=jnp.float32)

    # deterministic ring graph edge_index [2, E]
    src = jnp.arange(N, dtype=jnp.int32)
    dst = (src + 1) % N
    edge_index = jnp.stack([jnp.concatenate([src, dst]),
                            jnp.concatenate([dst, src])], axis=0)
    adj_i8, dinv = build_binary_adjacency(edge_index, N)

    # generator parameters (2-layer GCN, bias-free), deterministically initialized
    w1 = jax.random.normal(kw1, (FIN, H), dtype=jnp.float32) * (1.0 / jnp.sqrt(FIN))
    w2 = jax.random.normal(kw2, (H, H), dtype=jnp.float32) * (1.0 / jnp.sqrt(H))

    # fc = nn.Linear(fc_in_channels=H, fc_out_channels=C)
    wfc = jax.random.normal(kwfc, (H, C), dtype=jnp.float32) * (1.0 / jnp.sqrt(H))
    bfc = jax.random.normal(kb, (C,), dtype=jnp.float32) * 0.1

    # Gumbel(0,1) noise for gumbel_softmax (sampling is glue; the hot path is in-kernel)
    gumbel = jax.random.gumbel(kg, (N, C), dtype=jnp.float32)

    fwd = jax.jit(advers_mask_forward)
    z = jax.block_until_ready(fwd(adj_i8, dinv, x, w1, w2, wfc, bfc, gumbel))

    assert z.shape == (N, C)
    zf = z.astype(jnp.float32)
    assert bool(jnp.all(jnp.sum(zf, axis=-1) == 1.0))   # hard one-hot rows
    assert bool(jnp.all((zf == 0.0) | (zf == 1.0)))
    print("KERNEL_OK")
</pallas_src>

<mosaic_0001>
module attributes {stable_mosaic.version = 11 : i64} {
  func.func @gcn_layer1_kernel(%arg0: i32, %arg1: memref<16x16xi8, #tpu.memory_space<vmem>>, %arg2: memref<16x32xbf16, #tpu.memory_space<vmem>>, %arg3: memref<16x1xf32, #tpu.memory_space<vmem>>, %arg4: memref<16x32xbf16, #tpu.memory_space<vmem>>) attributes {dimension_semantics = [#tpu.dimension_semantics<parallel>], iteration_bounds = array<i64: 1>, scalar_prefetch = 0 : i64, scratch_operands = 0 : i64, tpu.core_type = #tpu.core_type<tc>, window_params = [{transform_indices = @transform_0, window_bounds = array<i64: 16, 16>}, {pipeline_mode = #tpu.pipeline_mode<synchronous>, transform_indices = @transform_1, window_bounds = array<i64: 16, 32>}, {transform_indices = @transform_2, window_bounds = array<i64: 16, 1>}, {transform_indices = @transform_3, window_bounds = array<i64: 16, 32>}]} {
    %c0 = arith.constant 0 : index
    %c0_0 = arith.constant 0 : index
    %0 = vector.load %arg1[%c0, %c0_0] : memref<16x16xi8, #tpu.memory_space<vmem>>, vector<16x16xi8>
    %1 = arith.sitofp %0 : vector<16x16xi8> to vector<16x16xf32>
    %2 = arith.truncf %1 : vector<16x16xf32> to vector<16x16xbf16>
    %c0_1 = arith.constant 0 : index
    %c0_2 = arith.constant 0 : index
    %3 = vector.load %arg2[%c0_1, %c0_2] : memref<16x32xbf16, #tpu.memory_space<vmem>>, vector<16x32xbf16>
    %cst = arith.constant dense<0.000000e+00> : vector<16x32xf32>
    %4 = tpu.matmul %2, %3, %cst {dimension_numbers = #tpu.dot_dimension_numbers<[1], [0], [0], [1], [0, 0, 1, 1], [], []>} : vector<16x16xbf16>, vector<16x32xbf16>, vector<16x32xf32> -> vector<16x32xf32>
    %c0_3 = arith.constant 0 : index
    %c0_4 = arith.constant 0 : index
    %5 = vector.load %arg3[%c0_3, %c0_4] : memref<16x1xf32, #tpu.memory_space<vmem>>, vector<16x1xf32>
    %6 = arith.mulf %5, %5 : vector<16x1xf32>
    %cst_5 = arith.constant 0.000000e+00 : f32
    %7 = vector.broadcast %cst_5 : f32 to vector<16x32xf32>
    %8 = arith.maximumf %4, %7 : vector<16x32xf32>
    %9 = vector.broadcast %6 : vector<16x1xf32> to vector<16x32xf32>
    %10 = arith.mulf %9, %8 : vector<16x32xf32>
    %11 = arith.truncf %10 : vector<16x32xf32> to vector<16x32xbf16>
    %c0_6 = arith.constant 0 : index
    %c0_7 = arith.constant 0 : index
    %12 = vector.load %arg4[%c0_6, %c0_7] : memref<16x32xbf16, #tpu.memory_space<vmem>>, vector<16x32xbf16>
    tpu.vector_store %arg4[%c0_6, %c0_7], %11 {strides = array<i32>} : memref<16x32xbf16, #tpu.memory_space<vmem>>, vector<16x32xbf16>,
    return
  }
  func.func @transform_0(%arg0: i32) -> (i32, i32) {
    %c0_i32 = arith.constant 0 : i32
    %c0_i32_0 = arith.constant 0 : i32
    return %arg0, %c0_i32 : i32, i32
  }
  func.func @transform_1(%arg0: i32) -> (i32, i32) {
    %c0_i32 = arith.constant 0 : i32
    %c0_i32_0 = arith.constant 0 : i32
    %c0_i32_1 = arith.constant 0 : i32
    return %c0_i32, %c0_i32_0 : i32, i32
  }
  func.func @transform_2(%arg0: i32) -> (i32, i32) {
    %c0_i32 = arith.constant 0 : i32
    %c0_i32_0 = arith.constant 0 : i32
    return %arg0, %c0_i32 : i32, i32
  }
  func.func @transform_3(%arg0: i32) -> (i32, i32) {
    %c0_i32 = arith.constant 0 : i32
    %c0_i32_0 = arith.constant 0 : i32
    return %arg0, %c0_i32 : i32, i32
  }
}

module attributes {stable_mosaic.version = 11 : i64} {
  func.func @logits_onehot_kernel(%arg0: i32, %arg1: memref<16x16xi8, #tpu.memory_space<vmem>>, %arg2: memref<16x32xbf16, #tpu.memory_space<vmem>>, %arg3: memref<16x1xf32, #tpu.memory_space<vmem>>, %arg4: memref<32x128xbf16, #tpu.memory_space<vmem>>, %arg5: memref<16x128xf32, #tpu.memory_space<vmem>>, %arg6: memref<16x128xbf16, #tpu.memory_space<vmem>>) attributes {dimension_semantics = [#tpu.dimension_semantics<parallel>], iteration_bounds = array<i64: 1>, scalar_prefetch = 0 : i64, scratch_operands = 0 : i64, tpu.core_type = #tpu.core_type<tc>, window_params = [{transform_indices = @transform_0, window_bounds = array<i64: 16, 16>}, {pipeline_mode = #tpu.pipeline_mode<synchronous>, transform_indices = @transform_1, window_bounds = array<i64: 16, 32>}, {transform_indices = @transform_2, window_bounds = array<i64: 16, 1>}, {pipeline_mode = #tpu.pipeline_mode<synchronous>, transform_indices = @transform_3, window_bounds = array<i64: 32, 128>}, {transform_indices = @transform_4, window_bounds = array<i64: 16, 128>}, {transform_indices = @transform_5, window_bounds = array<i64: 16, 128>}]} {
    %c0 = arith.constant 0 : index
    %c0_0 = arith.constant 0 : index
    %0 = vector.load %arg1[%c0, %c0_0] : memref<16x16xi8, #tpu.memory_space<vmem>>, vector<16x16xi8>
    %1 = arith.sitofp %0 : vector<16x16xi8> to vector<16x16xf32>
    %2 = arith.truncf %1 : vector<16x16xf32> to vector<16x16xbf16>
    %c0_1 = arith.constant 0 : index
    %c0_2 = arith.constant 0 : index
    %3 = vector.load %arg2[%c0_1, %c0_2] : memref<16x32xbf16, #tpu.memory_space<vmem>>, vector<16x32xbf16>
    %cst = arith.constant dense<0.000000e+00> : vector<16x32xf32>
    %4 = tpu.matmul %2, %3, %cst {dimension_numbers = #tpu.dot_dimension_numbers<[1], [0], [0], [1], [0, 0, 1, 1], [], []>} : vector<16x16xbf16>, vector<16x32xbf16>, vector<16x32xf32> -> vector<16x32xf32>
    %c0_3 = arith.constant 0 : index
    %c0_4 = arith.constant 0 : index
    %5 = vector.load %arg3[%c0_3, %c0_4] : memref<16x1xf32, #tpu.memory_space<vmem>>, vector<16x1xf32>
    %6 = vector.broadcast %5 : vector<16x1xf32> to vector<16x32xf32>
    %7 = arith.mulf %6, %4 : vector<16x32xf32>
    %8 = arith.truncf %7 : vector<16x32xf32> to vector<16x32xbf16>
    %c0_5 = arith.constant 0 : index
    %c0_6 = arith.constant 0 : index
    %9 = vector.load %arg4[%c0_5, %c0_6] : memref<32x128xbf16, #tpu.memory_space<vmem>>, vector<32x128xbf16>
    %cst_7 = arith.constant dense<0.000000e+00> : vector<16x128xf32>
    %10 = tpu.matmul %8, %9, %cst_7 {dimension_numbers = #tpu.dot_dimension_numbers<[1], [0], [0], [1], [0, 0, 1, 1], [], []>} : vector<16x32xbf16>, vector<32x128xbf16>, vector<16x128xf32> -> vector<16x128xf32>
    %c0_8 = arith.constant 0 : index
    %c0_9 = arith.constant 0 : index
    %11 = vector.load %arg5[%c0_8, %c0_9] : memref<16x128xf32, #tpu.memory_space<vmem>>, vector<16x128xf32>
    %12 = arith.addf %10, %11 : vector<16x128xf32>
    %13 = tpu.iota {dimensions = array<i32: 1>} : vector<16x128xi32>
    %cst_10 = arith.constant dense<0xFF800000> : vector<16xf32>
    %14 = vector.multi_reduction <maximumf>, %12, %cst_10 [1] : vector<16x128xf32> to vector<16xf32>
    %15 = vector.shape_cast %14 : vector<16xf32> to vector<16x1xf32>
    %16 = vector.broadcast %15 : vector<16x1xf32> to vector<16x128xf32>
    %17 = arith.cmpf oeq, %12, %16 : vector<16x128xf32>
    %c128_i32 = arith.constant 128 : i32
    %18 = vector.broadcast %c128_i32 : i32 to vector<16x128xi32>
    %19 = arith.select %17, %13, %18 : vector<16x128xi1>, vector<16x128xi32>
    %cst_11 = arith.constant dense<2147483647> : vector<16xi32>
    %20 = vector.multi_reduction <minsi>, %19, %cst_11 [1] : vector<16x128xi32> to vector<16xi32>
    %21 = vector.shape_cast %20 : vector<16xi32> to vector<16x1xi32>
    %22 = vector.broadcast %21 : vector<16x1xi32> to vector<16x128xi32>
    %23 = arith.cmpi eq, %13, %22 : vector<16x128xi32>
    %cst_12 = arith.constant 1.000000e+00 : f32
    %cst_13 = arith.constant 0.000000e+00 : f32
    %24 = vector.broadcast %cst_12 : f32 to vector<16x128xf32>
    %25 = vector.broadcast %cst_13 : f32 to vector<16x128xf32>
    %26 = arith.select %23, %24, %25 : vector<16x128xi1>, vector<16x128xf32>
    %27 = arith.truncf %26 : vector<16x128xf32> to vector<16x128xbf16>
    %c0_14 = arith.constant 0 : index
    %c0_15 = arith.constant 0 : index
    %28 = vector.load %arg6[%c0_14, %c0_15] : memref<16x128xbf16, #tpu.memory_space<vmem>>, vector<16x128xbf16>
    tpu.vector_store %arg6[%c0_14, %c0_15], %27 {strides = array<i32>} : memref<16x128xbf16, #tpu.memory_space<vmem>>, vector<16x128xbf16>,
    return
  }
  func.func @transform_0(%arg0: i32) -> (i32, i32) {
    %c0_i32 = arith.constant 0 : i32
    %c0_i32_0 = arith.constant 0 : i32
    return %arg0, %c0_i32 : i32, i32
  }
  func.func @transform_1(%arg0: i32) -> (i32, i32) {
    %c0_i32 = arith.constant 0 : i32
    %c0_i32_0 = arith.constant 0 : i32
    %c0_i32_1 = arith.constant 0 : i32
    return %c0_i32, %c0_i32_0 : i32, i32
  }
  func.func @transform_2(%arg0: i32) -> (i32, i32) {
    %c0_i32 = arith.constant 0 : i32
    %c0_i32_0 = arith.constant 0 : i32
    return %arg0, %c0_i32 : i32, i32
  }
  func.func @transform_3(%arg0: i32) -> (i32, i32) {
    %c0_i32 = arith.constant 0 : i32
    %c0_i32_0 = arith.constant 0 : i32
    %c0_i32_1 = arith.constant 0 : i32
    return %c0_i32, %c0_i32_0 : i32, i32
  }
  func.func @transform_4(%arg0: i32) -> (i32, i32) {
    %c0_i32 = arith.constant 0 : i32
    %c0_i32_0 = arith.constant 0 : i32
    return %arg0, %c0_i32 : i32, i32
  }
  func.func @transform_5(%arg0: i32) -> (i32, i32) {
    %c0_i32 = arith.constant 0 : i32
    %c0_i32_0 = arith.constant 0 : i32
    return %arg0, %c0_i32 : i32, i32
  }
}

</mosaic_0001>

<llo_original>
// kernel: advers_mask_forward.2
$region0: #{advers_mask_forward.2}
  #allocation0 [shape = 'u32[]', space=smem, size = 0x4, offset = 0x4, fixed_abs, tag = 'smem constant byte address 0x4 - core index']
  #allocation1 [shape = 'u32[144,128]{1,0:T(1,128)}', space=vmem, size = 0x12000, scoped, tag = 'internal scratch']
  %s0 = inlined_call_operand.vmem [shape: s8[16,16], index: 0, kind: input, shape index: {}]
  %s1 = inlined_call_operand.vmem [shape: bf16[16,32], index: 1, kind: input, shape index: {}]
  %s2 = inlined_call_operand.vmem [shape: f32[16,1], index: 2, kind: input, shape index: {}]
  %s3 = inlined_call_operand.vmem [shape: bf16[16,32], index: 3, kind: output, shape index: {}]
  %s4 = sld [smem:[#allocation0]]
  $region22: #{advers_mask_forward.2} parent=0
    _
  %s6 = ssub.s32 1, %s4
  %s7 = scalar_select 0, %s6, %s4
  // Predicated region
  $region2: #{advers_mask_forward.2} parent=0 // pred_check
    _
  $region3: #{advers_mask_forward.2} parent=0 // pred_check_branch
    %9 = sbr.rel (0) target = $region5
  $region4: #{advers_mask_forward.2} parent=0 // pred_region
    _
  $region5: #{advers_mask_forward.2} parent=0 // pred_fallthru
    _
  // Predicated region
  $region6: #{advers_mask_forward.2} parent=0 // pred_check
    _
  $region7: #{advers_mask_forward.2} parent=0 // pred_check_branch
    %11 = sbr.rel (0) target = $region9
  $region8: #{advers_mask_forward.2} parent=0 // pred_region
    _
  $region9: #{advers_mask_forward.2} parent=0 // pred_fallthru
    _
  // Predicated region
  $region10: #{advers_mask_forward.2} parent=0 // pred_check
    _
  $region11: #{advers_mask_forward.2} parent=0 // pred_check_branch
    %13 = sbr.rel (0) target = $region13
  $region12: #{advers_mask_forward.2} parent=0 // pred_region
    _
  $region13: #{advers_mask_forward.2} parent=0 // pred_fallthru
    _
  %v15 = vld [vmem:[%s0] sm:$0x3]
  %v16 = vld [vmem:[%s0 + $0x2] sm:$0x3]
  %v17 = vunpack.c.l.s8.bf16 %v15
  %v18 = vunpack.c.l.s8.bf16 %v16
  %v19 = vld [vmem:[%s1] sm:$0xf]
  %v20 = vld [vmem:[%s1 + $0x4] sm:$0xf]
  %v23 = vunpack.c.l.b16 %v17
  %v24 = vunpack.c.l.b16 %v18
  %v25 = vpack.c.b16 %v24, %v23
  %v28 = vunpack.c.l.b16 %v19
  %v29 = vunpack.c.l.b16 %v20
  %v30 = vpack.c.b16 %v29, %v28
  %vm32 = vcmask 130048
  %v34 = vsel %vm32, %v25, 0
  %36 = vmatprep.subr.bf16.mxu0 0
  %37 = vmatpush1.bf16.msra.mxu0 0
  %38 = vmatprep.subr.bf16.mxu0 0
  %39 = vmatpush1.bf16.msra.mxu0 0
  %40 = vmatprep.subr.bf16.mxu0 0
  %41 = vmatpush1.bf16.msra.mxu0 0
  %42 = vmatprep.subr.bf16.mxu0 0
  %43 = vmatpush1.bf16.msra.mxu0 0
  %44 = vmatprep.subr.bf16.mxu0 0
  %45 = vmatpush1.bf16.msra.mxu0 0
  %46 = vmatprep.subr.bf16.mxu0 0
  %47 = vmatpush1.bf16.msra.mxu0 0
  %48 = vmatprep.subr.bf16.mxu0 0
  %49 = vmatpush1.bf16.msra.mxu0 0
  %50 = vmatprep.subr.bf16.mxu0 0
  %51 = vmatpush1.bf16.msra.mxu0 %v30
  %52 = vmatprep.subr.bf16.mxu0 0
  %53 = vmatpush2.bf16.msra.mxu0 0
  %54 = vmatprep.subr.bf16.mxu0 0
  %55 = vmatpush2.bf16.msra.mxu0 0
  %56 = vmatprep.subr.bf16.mxu0 0
  %57 = vmatpush2.bf16.msra.mxu0 0
  %58 = vmatprep.subr.bf16.mxu0 0
  %59 = vmatpush2.bf16.msra.mxu0 0
  %60 = vmatprep.subr.bf16.mxu0 0
  %61 = vmatpush2.bf16.msra.mxu0 0
  %62 = vmatprep.subr.bf16.mxu0 0
  %63 = vmatpush2.bf16.msra.mxu0 0
  %64 = vmatprep.subr.bf16.mxu0 0
  %65 = vmatpush2.bf16.msra.mxu0 0
  %66 = vmatprep.subr.bf16.mxu0 0
  %67 = vmatpush2.bf16.msra.mxu0 0
  %68 = vmatprep.mubr.bf16.mxu0 0
  %69 = vmatmul.mubr.bf16.gmra.mxu0 %v34
  %v70 = vpop.f32.mrf.mxu0
  %v71 = vadd.f32 0.0, %v70
  %v72 = vpop.f32.mrf.mxu0
  %v73 = vpop.f32.mrf.mxu0
  %v74 = vadd.f32 0.0, %v73
  %v75 = vpop.f32.mrf.mxu0
  %76 = vdwg.mxu0
  %v77 = vld [vmem:[%s2] sm:$0xff]
  %v78 = vld [vmem:[%s2 + $0x8] sm:$0xff]
  %v79 = vmul.f32 %v77, %v77
  %v80 = vmul.f32 %v78, %v78
  %v81 = vmax.f32 %v71, 0.0
  %v82 = vmax.f32 %v74, 0.0
  %84 = vset.pattern.permute.xlu0 0
  %85 = vperm.xlu0 %84, %v79
  %v86 = vpop.permute.xlu0 %85
  %89 = vset.pattern.permute.xlu0 0
  %90 = vperm.xlu0 %89, %v80
  %v91 = vpop.permute.xlu0 %90
  %v93 = vmul.f32 %v86, %v81
  %v94 = vmul.f32 %v91, %v82
  %v95 = vpack.c.bf16 %v94, %v93
  %v97 = vunpack.c.l.b16 %v95
  %v98 = vunpack.c.h.b16 %v95
  %v99 = vpack.c.b16 %v97, %v97
  %v100 = vpack.c.b16 %v98, %v98
  %vm103 = vcmask 257024
  %104 = vst.msk [vmem:[%s3] sm:$0xf] %vm103, %v99
  %105 = vst.msk [vmem:[%s3 + $0x4] sm:$0xf] %vm103, %v100
  // Predicated region
  $region14: #{advers_mask_forward.2} parent=0 // pred_check
    _
  $region15: #{advers_mask_forward.2} parent=0 // pred_check_branch
    %107 = sbr.rel (0) target = $region17
  $region16: #{advers_mask_forward.2} parent=0 // pred_region
    _
  $region17: #{advers_mask_forward.2} parent=0 // pred_fallthru
    _
  // Predicated region
  $region18: #{advers_mask_forward.2} parent=0 // pred_check
    _
  $region19: #{advers_mask_forward.2} parent=0 // pred_check_branch
    %109 = sbr.rel (0) target = $region21
  $region20: #{advers_mask_forward.2} parent=0 // pred_region
    _
  $region21: #{advers_mask_forward.2} parent=0 // pred_fallthru
    _

// kernel: advers_mask_forward.3
$region0: #{advers_mask_forward.3}
  #allocation0 [shape = 'u32[]', space=smem, size = 0x4, offset = 0x4, fixed_abs, tag = 'smem constant byte address 0x4 - core index']
  #allocation1 [shape = 'u32[144,128]{1,0:T(1,128)}', space=vmem, size = 0x12000, scoped, tag = 'internal scratch']
  %s0 = inlined_call_operand.vmem [shape: s8[16,16], index: 0, kind: input, shape index: {}]
  %s1 = inlined_call_operand.vmem [shape: bf16[16,32], index: 1, kind: input, shape index: {}]
  %s2 = inlined_call_operand.vmem [shape: f32[16,1], index: 2, kind: input, shape index: {}]
  %s3 = inlined_call_operand.vmem [shape: bf16[32,128], index: 3, kind: input, shape index: {}]
  %s4 = inlined_call_operand.vmem [shape: f32[16,128], index: 4, kind: input, shape index: {}]
  %s5 = inlined_call_operand.vmem [shape: bf16[16,128], index: 5, kind: output, shape index: {}]
  %s6 = sld [smem:[#allocation0]]
  $region30: #{advers_mask_forward.3} parent=0
    _
  %s8 = ssub.s32 1, %s6
  %s9 = scalar_select 0, %s8, %s6
  // Predicated region
  $region2: #{advers_mask_forward.3} parent=0 // pred_check
    _
  $region3: #{advers_mask_forward.3} parent=0 // pred_check_branch
    %11 = sbr.rel (0) target = $region5
  $region4: #{advers_mask_forward.3} parent=0 // pred_region
    _
  $region5: #{advers_mask_forward.3} parent=0 // pred_fallthru
    _
  // Predicated region
  $region6: #{advers_mask_forward.3} parent=0 // pred_check
    _
  $region7: #{advers_mask_forward.3} parent=0 // pred_check_branch
    %13 = sbr.rel (0) target = $region9
  $region8: #{advers_mask_forward.3} parent=0 // pred_region
    _
  $region9: #{advers_mask_forward.3} parent=0 // pred_fallthru
    _
  // Predicated region
  $region10: #{advers_mask_forward.3} parent=0 // pred_check
    _
  $region11: #{advers_mask_forward.3} parent=0 // pred_check_branch
    %15 = sbr.rel (0) target = $region13
  $region12: #{advers_mask_forward.3} parent=0 // pred_region
    _
  $region13: #{advers_mask_forward.3} parent=0 // pred_fallthru
    _
  // Predicated region
  $region14: #{advers_mask_forward.3} parent=0 // pred_check
    _
  $region15: #{advers_mask_forward.3} parent=0 // pred_check_branch
    %17 = sbr.rel (0) target = $region17
  $region16: #{advers_mask_forward.3} parent=0 // pred_region
    _
  $region17: #{advers_mask_forward.3} parent=0 // pred_fallthru
    _
  // Predicated region
  $region18: #{advers_mask_forward.3} parent=0 // pred_check
    _
  $region19: #{advers_mask_forward.3} parent=0 // pred_check_branch
    %19 = sbr.rel (0) target = $region21
  $region20: #{advers_mask_forward.3} parent=0 // pred_region
    _
  $region21: #{advers_mask_forward.3} parent=0 // pred_fallthru
    _
  %v21 = vld [vmem:[%s0] sm:$0x3]
  %v22 = vld [vmem:[%s0 + $0x2] sm:$0x3]
  %v23 = vunpack.c.l.s8.bf16 %v21
  %v24 = vunpack.c.l.s8.bf16 %v22
  %v25 = vld [vmem:[%s1] sm:$0xf]
  %v26 = vld [vmem:[%s1 + $0x4] sm:$0xf]
  %v29 = vunpack.c.l.b16 %v23
  %v30 = vunpack.c.l.b16 %v24
  %v31 = vpack.c.b16 %v30, %v29
  %v34 = vunpack.c.l.b16 %v25
  %v35 = vunpack.c.l.b16 %v26
  %v36 = vpack.c.b16 %v35, %v34
  %vm38 = vcmask 130048
  %v40 = vsel %vm38, %v31, 0
  %42 = vmatprep.subr.bf16.mxu0 0
  %43 = vmatpush1.bf16.msra.mxu0 0
  %44 = vmatprep.subr.bf16.mxu0 0
  %45 = vmatpush1.bf16.msra.mxu0 0
  %46 = vmatprep.subr.bf16.mxu0 0
  %47 = vmatpush1.bf16.msra.mxu0 0
  %48 = vmatprep.subr.bf16.mxu0 0
  %49 = vmatpush1.bf16.msra.mxu0 0
  %50 = vmatprep.subr.bf16.mxu0 0
  %51 = vmatpush1.bf16.msra.mxu0 0
  %52 = vmatprep.subr.bf16.mxu0 0
  %53 = vmatpush1.bf16.msra.mxu0 0
  %54 = vmatprep.subr.bf16.mxu0 0
  %55 = vmatpush1.bf16.msra.mxu0 0
  %56 = vmatprep.subr.bf16.mxu0 0
  %57 = vmatpush1.bf16.msra.mxu0 %v36
  %58 = vmatprep.subr.bf16.mxu0 0
  %59 = vmatpush2.bf16.msra.mxu0 0
  %60 = vmatprep.subr.bf16.mxu0 0
  %61 = vmatpush2.bf16.msra.mxu0 0
  %62 = vmatprep.subr.bf16.mxu0 0
  %63 = vmatpush2.bf16.msra.mxu0 0
  %64 = vmatprep.subr.bf16.mxu0 0
  %65 = vmatpush2.bf16.msra.mxu0 0
  %66 = vmatprep.subr.bf16.mxu0 0
  %67 = vmatpush2.bf16.msra.mxu0 0
  %68 = vmatprep.subr.bf16.mxu0 0
  %69 = vmatpush2.bf16.msra.mxu0 0
  %70 = vmatprep.subr.bf16.mxu0 0
  %71 = vmatpush2.bf16.msra.mxu0 0
  %72 = vmatprep.subr.bf16.mxu0 0
  %73 = vmatpush2.bf16.msra.mxu0 0
  %74 = vmatprep.mubr.bf16.mxu0 0
  %75 = vmatmul.mubr.bf16.gmra.mxu0 %v40
  %v76 = vpop.f32.mrf.mxu0
  %v77 = vadd.f32 0.0, %v76
  %v78 = vpop.f32.mrf.mxu0
  %v79 = vpop.f32.mrf.mxu0
  %v80 = vadd.f32 0.0, %v79
  %v81 = vpop.f32.mrf.mxu0
  %82 = vdwg.mxu0
  %v83 = vld [vmem:[%s2] sm:$0xff]
  %v84 = vld [vmem:[%s2 + $0x8] sm:$0xff]
  %86 = vset.pattern.permute.xlu0 0
  %87 = vperm.xlu0 %86, %v83
  %v88 = vpop.permute.xlu0 %87
  %91 = vset.pattern.permute.xlu0 0
  %92 = vperm.xlu0 %91, %v84
  %v93 = vpop.permute.xlu0 %92
  %v95 = vmul.f32 %v88, %v77
  %v96 = vmul.f32 %v93, %v80
  %v97 = vpack.c.bf16 %v96, %v95
  %v98 = vld [vmem:[%s3] sm:$0xf]
  %v99 = vld [vmem:[%s3 + $0x4] sm:$0xf]
  %v100 = vld [vmem:[%s3 + $0x8] sm:$0xf]
  %v101 = vld [vmem:[%s3 + $0xc] sm:$0xf]
  %v102 = vld [vmem:[%s4] sm:$0xff]
  %v103 = vld [vmem:[%s4 + $0x8] sm:$0xff]
  %v108 = vunpack.c.l.b16 %v98
  %v109 = vunpack.c.l.b16 %v99
  %v110 = vunpack.c.l.b16 %v100
  %v111 = vunpack.c.l.b16 %v101
  %v112 = vpack.c.b16 %v109, %v108
  %v113 = vpack.c.b16 %v111, %v110
  %vm116 = vcmask 261120
  %v118 = vsel %vm116, %v97, 0
  %120 = vmatprep.subr.bf16.mxu0 0
  %121 = vmatpush1.bf16.msra.mxu0 0
  %122 = vmatprep.subr.bf16.mxu0 0
  %123 = vmatpush1.bf16.msra.mxu0 0
  %124 = vmatprep.subr.bf16.mxu0 0
  %125 = vmatpush1.bf16.msra.mxu0 0
  %126 = vmatprep.subr.bf16.mxu0 0
  %127 = vmatpush1.bf16.msra.mxu0 0
  %128 = vmatprep.subr.bf16.mxu0 0
  %129 = vmatpush1.bf16.msra.mxu0 0
  %130 = vmatprep.subr.bf16.mxu0 0
  %131 = vmatpush1.bf16.msra.mxu0 0
  %132 = vmatprep.subr.bf16.mxu0 0
  %133 = vmatpush1.bf16.msra.mxu0 %v113
  %134 = vmatprep.subr.bf16.mxu0 0
  %135 = vmatpush1.bf16.msra.mxu0 %v112
  %136 = vmatprep.subr.bf16.mxu0 0
  %137 = vmatpush2.bf16.msra.mxu0 0
  %138 = vmatprep.subr.bf16.mxu0 0
  %139 = vmatpush2.bf16.msra.mxu0 0
  %140 = vmatprep.subr.bf16.mxu0 0
  %141 = vmatpush2.bf16.msra.mxu0 0
  %142 = vmatprep.subr.bf16.mxu0 0
  %143 = vmatpush2.bf16.msra.mxu0 0
  %144 = vmatprep.subr.bf16.mxu0 0
  %145 = vmatpush2.bf16.msra.mxu0 0
  %146 = vmatprep.subr.bf16.mxu0 0
  %147 = vmatpush2.bf16.msra.mxu0 0
  %148 = vmatprep.subr.bf16.mxu0 0
  %149 = vmatpush2.bf16.msra.mxu0 0
  %150 = vmatprep.subr.bf16.mxu0 0
  %151 = vmatpush2.bf16.msra.mxu0 0
  %152 = vmatprep.mubr.bf16.mxu0 0
  %153 = vmatmul.mubr.bf16.gmra.mxu0 %v118
  %v154 = vpop.f32.mrf.mxu0
  %v155 = vadd.f32 %v102, %v154
  %v156 = vpop.f32.mrf.mxu0
  %v157 = vpop.f32.mrf.mxu0
  %v158 = vadd.f32 %v103, %v157
  %v159 = vpop.f32.mrf.mxu0
  %160 = vdwg.mxu0
  %v161 = vlaneseq
  %v162 = vand.u32 %v161, 127
  %163 = vmax.xlane.f32.xlu0 %v155
  %v164 = vpop.xlane.xlu0 %163
  %165 = vmax.xlane.f32.xlu0 %v158
  %v166 = vpop.xlane.xlu0 %165
  %vm167 = vcmp.eq.f32.partialorder %v155, %v164
  %vm168 = vcmp.eq.f32.partialorder %v158, %v166
  %v169 = vsel %vm167, %v162, 128
  %v170 = vsel %vm168, %v162, 128
  %v171 = vand.u32 %v169, 65535
  %v172 = vshra.s32 %v169, 16
  %v173 = vcvt.s32.f32 %v171
  %v174 = vcvt.s32.f32 %v172
  %175 = vmin.xlane.f32.xlu0 %v174
  %v176 = vpop.xlane.xlu0 %175
  %vm177 = vcmp.eq.f32.partialorder %v174, %v176
  %v178 = vsel %vm177, %v173, inf
  %179 = vmin.xlane.f32.xlu0 %v178
  %v180 = vpop.xlane.xlu0 %179
  %v181 = vcvt.f32.s32 %v180
  %v182 = vcvt.f32.s32 %v176
  %v183 = vshll.u32 %v182, 16
  %v184 = vadd.s32 %v183, %v181
  %v185 = vand.u32 %v170, 65535
  %v186 = vshra.s32 %v170, 16
  %v187 = vcvt.s32.f32 %v185
  %v188 = vcvt.s32.f32 %v186
  %189 = vmin.xlane.f32.xlu0 %v188
  %v190 = vpop.xlane.xlu0 %189
  %vm191 = vcmp.eq.f32.partialorder %v188, %v190
  %v192 = vsel %vm191, %v187, inf
  %193 = vmin.xlane.f32.xlu0 %v192
  %v194 = vpop.xlane.xlu0 %193
  %v195 = vcvt.f32.s32 %v194
  %v196 = vcvt.f32.s32 %v190
  %v197 = vshll.u32 %v196, 16
  %v198 = vadd.s32 %v197, %v195
  %vm199 = vcmp.eq.s32.totalorder %v162, %v184
  %vm200 = vcmp.eq.s32.totalorder %v162, %v198
  %v201 = vsel %vm199, 1.0, 0.0
  %v202 = vsel %vm200, 1.0, 0.0
  %v203 = vpack.c.bf16 %v202, %v201
  %v205 = vunpack.c.l.b16 %v203
  %v206 = vunpack.c.h.b16 %v203
  %v207 = vpack.c.b16 %v205, %v205
  %v208 = vpack.c.b16 %v206, %v206
  %211 = vst [vmem:[%s5] sm:$0xf] %v207
  %212 = vst [vmem:[%s5 + $0x4] sm:$0xf] %v208
  // Predicated region
  $region22: #{advers_mask_forward.3} parent=0 // pred_check
    _
  $region23: #{advers_mask_forward.3} parent=0 // pred_check_branch
    %214 = sbr.rel (0) target = $region25
  $region24: #{advers_mask_forward.3} parent=0 // pred_region
    _
  $region25: #{advers_mask_forward.3} parent=0 // pred_fallthru
    _
  // Predicated region
  $region26: #{advers_mask_forward.3} parent=0 // pred_check
    _
  $region27: #{advers_mask_forward.3} parent=0 // pred_check_branch
    %216 = sbr.rel (0) target = $region29
  $region28: #{advers_mask_forward.3} parent=0 // pred_region
    _
  $region29: #{advers_mask_forward.3} parent=0 // pred_fallthru
    _

</llo_original>
